<compile_context>
chip_gen: v5e
topology: v5e:2x2
jax: 0.10.0
libtpu: 0.0.40
codegen_flags: <defaults>
</compile_context>

<pallas_src>
import numpy as np
import jax
import jax.numpy as jnp
from jax.experimental import pallas as pl
from jax.experimental.pallas import tpu as pltpu


def _round_up(x, m):
    return ((x + m - 1) // m) * m


def _vmem_capacity_bytes():
    """Physical VMEM of the attached TPU; conservative (v7x) default if the query fails."""
    try:
        return int(pltpu.get_tpu_info().vmem_capacity_bytes)
    except Exception:
        return 64 * 1024 * 1024


def _choose_tm(rows, feat, n_cls, out_itemsize, tile_budget, tm_max):
    """Row-tile size: largest that fits the VMEM budget, multiple of 8 sublanes,
    capped so the parallel row axis has >= 2 steps (v7x has 2 TensorCores)."""
    if rows <= 8:
        return rows
    # bytes per tile row: double-buffered f32 x tile + double-buffered out tile
    # + ~2 f32 (tm, C) intermediates (logits, exp) + bf16 copy of the x row.
    per_row = 2 * feat * 4 + 2 * n_cls * out_itemsize + 2 * n_cls * 4 + feat * 2
    fixed = 2 * (feat * n_cls * 2 + n_cls * 4)          # resident bf16 weight + f32 bias
    avail = tile_budget - fixed
    tm = max(8, min(tm_max, (max(avail, 0) // max(per_row, 1)) // 8 * 8))
    tm = min(tm, _round_up(pl.cdiv(rows, 2), 8))        # >= 2 grid steps -> both v7x TCs busy
    if tm >= rows:
        tm = rows                                       # single full-extent block (always legal)
    return tm


def _head_logsoftmax_kernel(x_ref, w_ref, b_ref, o_ref):
    """One row tile: logits = x @ W + b ; out = log_softmax(logits, axis=-1).

    x_ref: (tm, F)  f32/bf16 activation row tile (cast to bf16 here, not in XLA)
    w_ref: (F, C)   bf16 weight, resident across the grid
    b_ref: (1, C)   f32 bias (must stay f32: it feeds the lse directly)
    o_ref: (tm, C)  log-probabilities in the requested output dtype
    """
    x = x_ref[...].astype(jnp.bfloat16)                 # VPU cast, hidden under the matmul
    logits = jnp.dot(x, w_ref[...], preferred_element_type=jnp.float32)
    logits = logits + b_ref[...]
    # Numerically-stable log-softmax in f32 (v5e-safe: no bf16 EUP assumed).
    m = jnp.max(logits, axis=-1, keepdims=True)
    z = logits - m
    lse = jnp.log(jnp.sum(jnp.exp(z), axis=-1, keepdims=True))
    o_ref[...] = (z - lse).astype(o_ref.dtype)


def _param_spec(block_shape, single_buffer):
    """BlockSpec for grid-resident parameters; optionally single-buffered."""
    idx = lambda i: (0, 0)
    if single_buffer and hasattr(pl, "Buffered"):
        try:
            return pl.BlockSpec(block_shape, idx, pipeline_mode=pl.Buffered(1))
        except TypeError:
            pass
    return pl.BlockSpec(block_shape, idx)


def head_log_softmax(x_tnf, w_fc, b_1c, *, out_dtype=jnp.bfloat16, tm_max=512):
    """Head Linear + log_softmax over the class axis (dim=2).

    x_tnf: (T, N, F) neck output (CTC layout), any float dtype
    w_fc:  (F, C)    bf16 weight (already transposed from nn.Linear's (C, F))
    b_1c:  (1, C)    f32 bias
    Returns (T, N, C) log-probabilities in `out_dtype`.
    """
    T, N, F = x_tnf.shape
    Fw, C = w_fc.shape
    assert Fw == F, (Fw, F)
    rows = T * N
    x2d = x_tnf.reshape(rows, F)                        # layout-preserving reshape

    cap = _vmem_capacity_bytes()
    tile_budget = int(cap * 0.65)                       # tiles sized well below physical VMEM
    vmem_limit = int(cap * 0.85)                        # headroom for compiler internal scratch
    out_itemsize = jnp.dtype(out_dtype).itemsize
    tm = _choose_tm(rows, F, C, out_itemsize, tile_budget, tm_max)
    grid = (pl.cdiv(rows, tm),)                         # boundary block handled by Pallas masking

    # Single-buffer the resident weight/bias only when double-buffering them would
    # consume a large share of VMEM (v7x with big charsets); no-op for small heads.
    single_buffer = (2 * F * C * 2) > (tile_budget // 2)

    out2d = pl.pallas_call(
        _head_logsoftmax_kernel,
        out_shape=jax.ShapeDtypeStruct((rows, C), out_dtype),
        grid_spec=pltpu.PrefetchScalarGridSpec(
            num_scalar_prefetch=0,
            grid=grid,
            in_specs=[
                pl.BlockSpec((tm, F), lambda i: (i, 0)),   # activation row tile
                _param_spec((F, C), single_buffer),        # full weight, resident
                _param_spec((1, C), single_buffer),        # bias, resident
            ],
            out_specs=pl.BlockSpec((tm, C), lambda i: (i, 0)),
        ),
        compiler_params=pltpu.CompilerParams(
            dimension_semantics=("parallel",),
            vmem_limit_bytes=vmem_limit,
        ),
    )(x2d, w_fc, b_1c)

    return out2d.reshape(T, N, C)


class BaseTextRecModelPallas:
    """Inference `process()` of BaseTextRecModel: head Linear + log_softmax(dim=2)
    implemented as a Pallas TPU kernel (backbone / neck treated as identity)."""

    def __init__(self, neck_out_features, out_features, max_seq_len=25,
                 out_dtype=jnp.bfloat16, key=None):
        self.max_seq_len = max_seq_len
        self.out_features = out_features
        self.out_dtype = out_dtype
        key = key if key is not None else jax.random.PRNGKey(0)
        kw, kb = jax.random.split(key)
        # Mimic nn.Linear init: U(-1/sqrt(fan_in), 1/sqrt(fan_in)); layout (C, F).
        bound = 1.0 / np.sqrt(neck_out_features)
        self.weight = jax.random.uniform(
            kw, (out_features, neck_out_features), jnp.float32, -bound, bound)
        self.bias = jax.random.uniform(
            kb, (out_features,), jnp.float32, -bound, bound)
        # Hoisted, cached head parameters (done ONCE here, not per process() call):
        # transpose (C, F) -> (F, C) for x @ W and cast to bf16 for the MXU.
        # Bias stays f32 — it is added to the f32 accumulator and feeds the lse.
        self._w_fc = jnp.asarray(self.weight.T, dtype=jnp.bfloat16)
        self._b_1c = jnp.asarray(self.bias, dtype=jnp.float32).reshape(1, out_features)

    def process(self, x_tnf, out_dtype=None):
        # input = nn.Identity; backbone / neck = identity (see TODO above).
        return head_log_softmax(x_tnf, self._w_fc, self._b_1c,
                                out_dtype=self.out_dtype if out_dtype is None else out_dtype)

    __call__ = process


if __name__ == "__main__":
    key = jax.random.PRNGKey(0)
    T, N, F_NECK, C = 8, 2, 32, 16          # seq len, batch, neck features, classes

    kx, kp = jax.random.split(key)
    x = jax.random.normal(kx, (T, N, F_NECK), jnp.float32)   # neck output (T, N, F)

    model = BaseTextRecModelPallas(neck_out_features=F_NECK, out_features=C, key=kp)

    # Default (performance) path: bf16 log-probabilities.
    out_bf16 = jax.block_until_ready(model(x))
    assert out_bf16.shape == (T, N, C)
    assert out_bf16.dtype == jnp.bfloat16

    # Numerics path: f32 output, checked tightly against a reference that applies
    # the same bf16 operand quantization (the kernel accumulates in f32).
    out_f32 = jax.block_until_ready(model.process(x, out_dtype=jnp.float32))
    xq = x.astype(jnp.bfloat16).astype(jnp.float32)
    wq = model.weight.astype(jnp.bfloat16).astype(jnp.float32)
    logits_q = jnp.einsum("tnf,cf->tnc", xq, wq,
                          precision=jax.lax.Precision.HIGHEST) + model.bias
    ref_q = jax.nn.log_softmax(logits_q, axis=2)
    np.testing.assert_allclose(np.asarray(out_f32), np.asarray(ref_q),
                               atol=2e-4, rtol=2e-4)

    # Loose check of the default bf16 output against the full-f32
    # PyTorch-equivalent reference (difference = bf16 operand quantization of the
    # matmul + the bf16 output cast).
    logits_ref = jnp.einsum("tnf,cf->tnc", x, model.weight,
                            precision=jax.lax.Precision.HIGHEST) + model.bias
    ref = jax.nn.log_softmax(logits_ref, axis=2)
    np.testing.assert_allclose(np.asarray(out_bf16.astype(jnp.float32)),
                               np.asarray(ref), atol=6e-2, rtol=6e-2)

    print("KERNEL_OK")
</pallas_src>

<mosaic_0001>
module attributes {stable_mosaic.version = 11 : i64} {
  func.func @_head_logsoftmax_kernel(%arg0: i32, %arg1: memref<8x32xf32, #tpu.memory_space<vmem>>, %arg2: memref<32x16xbf16, #tpu.memory_space<vmem>>, %arg3: memref<1x16xf32, #tpu.memory_space<vmem>>, %arg4: memref<8x16xbf16, #tpu.memory_space<vmem>>) attributes {dimension_semantics = [#tpu.dimension_semantics<parallel>], iteration_bounds = array<i64: 2>, scalar_prefetch = 0 : i64, scratch_operands = 0 : i64, tpu.core_type = #tpu.core_type<tc>, window_params = [{transform_indices = @transform_0, window_bounds = array<i64: 8, 32>}, {pipeline_mode = #tpu.pipeline_mode<synchronous>, transform_indices = @transform_1, window_bounds = array<i64: 32, 16>}, {pipeline_mode = #tpu.pipeline_mode<synchronous>, transform_indices = @transform_2, window_bounds = array<i64: 1, 16>}, {transform_indices = @transform_3, window_bounds = array<i64: 8, 16>}]} {
    %c0 = arith.constant 0 : index
    %c0_0 = arith.constant 0 : index
    %0 = vector.load %arg1[%c0, %c0_0] : memref<8x32xf32, #tpu.memory_space<vmem>>, vector<8x32xf32>
    %1 = arith.truncf %0 : vector<8x32xf32> to vector<8x32xbf16>
    %c0_1 = arith.constant 0 : index
    %c0_2 = arith.constant 0 : index
    %2 = vector.load %arg2[%c0_1, %c0_2] : memref<32x16xbf16, #tpu.memory_space<vmem>>, vector<32x16xbf16>
    %cst = arith.constant dense<0.000000e+00> : vector<8x16xf32>
    %3 = tpu.matmul %1, %2, %cst {dimension_numbers = #tpu.dot_dimension_numbers<[1], [0], [0], [1], [0, 0, 1, 1], [], []>} : vector<8x32xbf16>, vector<32x16xbf16>, vector<8x16xf32> -> vector<8x16xf32>
    %c0_3 = arith.constant 0 : index
    %c0_4 = arith.constant 0 : index
    %4 = vector.load %arg3[%c0_3, %c0_4] : memref<1x16xf32, #tpu.memory_space<vmem>>, vector<1x16xf32>
    %5 = vector.broadcast %4 : vector<1x16xf32> to vector<8x16xf32>
    %6 = arith.addf %3, %5 : vector<8x16xf32>
    %cst_5 = arith.constant dense<0xFF800000> : vector<8xf32>
    %7 = vector.multi_reduction <maximumf>, %6, %cst_5 [1] : vector<8x16xf32> to vector<8xf32>
    %8 = vector.shape_cast %7 : vector<8xf32> to vector<8x1xf32>
    %9 = vector.broadcast %8 : vector<8x1xf32> to vector<8x16xf32>
    %10 = arith.subf %6, %9 : vector<8x16xf32>
    %11 = math.exp %10 : vector<8x16xf32>
    %cst_6 = arith.constant dense<0.000000e+00> : vector<8xf32>
    %12 = vector.multi_reduction <add>, %11, %cst_6 [1] : vector<8x16xf32> to vector<8xf32>
    %13 = vector.shape_cast %12 : vector<8xf32> to vector<8x1xf32>
    %14 = math.log %13 : vector<8x1xf32>
    %15 = vector.broadcast %14 : vector<8x1xf32> to vector<8x16xf32>
    %16 = arith.subf %10, %15 : vector<8x16xf32>
    %17 = arith.truncf %16 : vector<8x16xf32> to vector<8x16xbf16>
    %c0_7 = arith.constant 0 : index
    %c0_8 = arith.constant 0 : index
    %18 = vector.load %arg4[%c0_7, %c0_8] : memref<8x16xbf16, #tpu.memory_space<vmem>>, vector<8x16xbf16>
    tpu.vector_store %arg4[%c0_7, %c0_8], %17 {strides = array<i32>} : memref<8x16xbf16, #tpu.memory_space<vmem>>, vector<8x16xbf16>,
    return
  }
  func.func @transform_0(%arg0: i32) -> (i32, i32) {
    %c0_i32 = arith.constant 0 : i32
    %c0_i32_0 = arith.constant 0 : i32
    return %arg0, %c0_i32 : i32, i32
  }
  func.func @transform_1(%arg0: i32) -> (i32, i32) {
    %c0_i32 = arith.constant 0 : i32
    %c0_i32_0 = arith.constant 0 : i32
    %c0_i32_1 = arith.constant 0 : i32
    return %c0_i32, %c0_i32_0 : i32, i32
  }
  func.func @transform_2(%arg0: i32) -> (i32, i32) {
    %c0_i32 = arith.constant 0 : i32
    %c0_i32_0 = arith.constant 0 : i32
    %c0_i32_1 = arith.constant 0 : i32
    return %c0_i32, %c0_i32_0 : i32, i32
  }
  func.func @transform_3(%arg0: i32) -> (i32, i32) {
    %c0_i32 = arith.constant 0 : i32
    %c0_i32_0 = arith.constant 0 : i32
    return %arg0, %c0_i32 : i32, i32
  }
}

</mosaic_0001>

<llo_original>
// kernel: tpu_custom_call.1
$region0: #{tpu_custom_call.1}
  #allocation0 [shape = 'u32[]', space=smem, size = 0x4, offset = 0x4, fixed_abs, tag = 'smem constant byte address 0x4 - core index']
  #allocation1 [shape = 'u32[72,128]{1,0:T(1,128)}', space=vmem, size = 0x9000, scoped, tag = 'internal scratch']
  %s0 = inlined_call_operand.vmem [shape: f32[16,32], index: 0, kind: input, shape index: {}]
  %s1 = inlined_call_operand.vmem [shape: bf16[32,16], index: 1, kind: input, shape index: {}]
  %s2 = inlined_call_operand.vmem [shape: f32[1,16], index: 2, kind: input, shape index: {}]
  %s3 = inlined_call_operand.hbm [shape: bf16[16,16], index: 3, kind: output, shape index: {}]
  %s4 = sld [smem:[#allocation0]]
  $region45: #{tpu_custom_call.1} parent=0
    _
  %s6 = ssub.s32 1, %s4
  %s7 = scalar_select 0, %s6, %s4
  $region1: #{tpu_custom_call.1} parent=0
    #allocation2 [shape = 'u8[4096]{0}', space=vmem, size = 0x1000, scoped, tag = 'output window, operand 0']
    #allocation3 [shape = 's32[2]{0}', space=sflag, size = 0x8, scoped, tag = 'scoped memory for tpu_custom_call.1']
    %8 = vsyncpa [#allocation3], 0
    %s9 = scalar_lea.sflag [#allocation3], 1
    %10 = vsyncpa %s9, 0
    loop: start=0, step=1, limit=4
    $region2: #{tpu_custom_call.1} parent=1 // loop_pre_header
      _
    $region3: #{tpu_custom_call.1} parent=1 // loop_header
      %s12 = sphi 0, %s16
      %p13 = scmp.ge.s32.totalorder %s12, 4
      %s22 = sphi 0, %s24
      %s25 = sphi 0, %s22
      %s26 = sphi 0, %s25
      %s42 = sphi 0, %s26
      %s46 = sphi 0, %s46
      %s48 = sphi 0, %s46
      %s49 = sphi 0, %s48
      %s63 = sphi 0, %s49
      %s67 = sphi 0, %s67
      %s69 = sphi 0, %s67
      %s70 = sphi 0, %s69
      %s84 = sphi 0, %s70
      %s90 = sphi 0, %s92
      %s93 = sphi 0, %s90
      %s94 = sphi 0, %s93
      %s110 = sphi 0, %s94
    $region4: #{tpu_custom_call.1} parent=1 // loop_header_branch
      %15 = sbr.rel (%p13) target = $region8
    $region5: #{tpu_custom_call.1} parent=1 // loop_body
      %s17 = ssub.s32 %s12, 1
      %s18 = ssub.s32 %s12, 2
      %s19 = sadd.s32 %s12, 1
      %s20 = ssub.s32 %s12, %s19
      %p21 = scmp.eq.s32.totalorder %s20, 0
      %s23 = sadd.s32 %s22, 1
      %s24 = scalar_select %p21, %s22, %s23
      %p27 = pneg %p21
      %p28 = scmp.eq.s32.totalorder %s12, 1
      %p29 = por %p27, %p28
      %p30 = scmp.ne.s32.totalorder %s22, %s25
      %p31 = scmp.eq.s32.totalorder %s12, 0
      %p32 = por %p30, %p31
      %p33 = scmp.ne.s32.totalorder %s22, %s25
      %p34 = scmp.eq.s32.totalorder %s17, 1
      %p35 = por %p33, %p34
      %p36 = scmp.ne.s32.totalorder %s25, %s26
      %p37 = scmp.eq.s32.totalorder %s17, 0
      %p38 = por %p36, %p37
      %p39 = scmp.ne.s32.totalorder %s25, %s26
      %p40 = scmp.eq.s32.totalorder %s18, 1
      %p41 = por %p39, %p40
      %p43 = scmp.ne.s32.totalorder %s26, %s42
      %p44 = scmp.eq.s32.totalorder %s18, 0
      %p45 = por %p43, %p44
      %s47 = sadd.s32 %s46, 1
      %p50 = scmp.eq.s32.totalorder %s12, 1
      %p51 = scmp.ne.s32.totalorder %s46, %s48
      %p52 = scmp.eq.s32.totalorder %s12, 0
      %p53 = por %p51, %p52
      %p54 = scmp.ne.s32.totalorder %s46, %s48
      %p55 = scmp.eq.s32.totalorder %s17, 1
      %p56 = por %p54, %p55
      %p57 = scmp.ne.s32.totalorder %s48, %s49
      %p58 = scmp.eq.s32.totalorder %s17, 0
      %p59 = por %p57, %p58
      %p60 = scmp.ne.s32.totalorder %s48, %s49
      %p61 = scmp.eq.s32.totalorder %s18, 1
      %p62 = por %p60, %p61
      %p64 = scmp.ne.s32.totalorder %s49, %s63
      %p65 = scmp.eq.s32.totalorder %s18, 0
      %p66 = por %p64, %p65
      %s68 = sadd.s32 %s67, 1
      %p71 = scmp.eq.s32.totalorder %s12, 1
      %p72 = scmp.ne.s32.totalorder %s67, %s69
      %p73 = scmp.eq.s32.totalorder %s12, 0
      %p74 = por %p72, %p73
      %p75 = scmp.ne.s32.totalorder %s67, %s69
      %p76 = scmp.eq.s32.totalorder %s17, 1
      %p77 = por %p75, %p76
      %p78 = scmp.ne.s32.totalorder %s69, %s70
      %p79 = scmp.eq.s32.totalorder %s17, 0
      %p80 = por %p78, %p79
      %p81 = scmp.ne.s32.totalorder %s69, %s70
      %p82 = scmp.eq.s32.totalorder %s18, 1
      %p83 = por %p81, %p82
      %p85 = scmp.ne.s32.totalorder %s70, %s84
      %p86 = scmp.eq.s32.totalorder %s18, 0
      %p87 = por %p85, %p86
      %s88 = ssub.s32 %s12, %s19
      %p89 = scmp.eq.s32.totalorder %s88, 0
      %s91 = sadd.s32 %s90, 1
      %s92 = scalar_select %p89, %s90, %s91
      %p95 = pneg %p89
      %p96 = scmp.eq.s32.totalorder %s12, 1
      %p97 = por %p95, %p96
      %p98 = scmp.ne.s32.totalorder %s90, %s93
      %p99 = scmp.eq.s32.totalorder %s12, 0
      %p100 = por %p98, %p99
      %p101 = scmp.ne.s32.totalorder %s90, %s93
      %p102 = scmp.eq.s32.totalorder %s17, 1
      %p103 = por %p101, %p102
      %p104 = scmp.ne.s32.totalorder %s93, %s94
      %p105 = scmp.eq.s32.totalorder %s17, 0
      %p106 = por %p104, %p105
      %p107 = scmp.ne.s32.totalorder %s93, %s94
      %p108 = scmp.eq.s32.totalorder %s18, 1
      %p109 = por %p107, %p108
      %p111 = scmp.ne.s32.totalorder %s94, %s110
      %p112 = scmp.eq.s32.totalorder %s18, 0
      %p113 = por %p111, %p112
      %p114 = scmp.le.s32.totalorder 1, %s12
      %p115 = scmp.lt.s32.totalorder %s12, 3
      %p116 = pnand %p114, %p115
      %p117 = pneg %p116
      // Predicated region
      $region9: #{tpu_custom_call.1} parent=5 // pred_check
        _
      $region10: #{tpu_custom_call.1} parent=5 // pred_check_branch
        %119 = sbr.rel (%p116) target = $region12
      $region11: #{tpu_custom_call.1} parent=5 // pred_region
        %s120 = ssub.s32 %s12, 1
        // Predicated region
        $region13: #{tpu_custom_call.1} parent=11 // pred_check
          %p121 = pneg %p59
        $region14: #{tpu_custom_call.1} parent=11 // pred_check_branch
          %123 = sbr.rel (%p121) target = $region16
        $region15: #{tpu_custom_call.1} parent=11 // pred_region
          _
        $region16: #{tpu_custom_call.1} parent=11 // pred_fallthru
          _
        // Predicated region
        $region17: #{tpu_custom_call.1} parent=11 // pred_check
          %p124 = pneg %p80
        $region18: #{tpu_custom_call.1} parent=11 // pred_check_branch
          %126 = sbr.rel (%p124) target = $region20
        $region19: #{tpu_custom_call.1} parent=11 // pred_region
          _
        $region20: #{tpu_custom_call.1} parent=11 // pred_fallthru
          _
      $region12: #{tpu_custom_call.1} parent=5 // pred_fallthru
        _
      %p127 = scmp.lt.s32.totalorder %s12, 2
      // Predicated region
      $region21: #{tpu_custom_call.1} parent=5 // pred_check
        %p128 = pneg %p127
      $region22: #{tpu_custom_call.1} parent=5 // pred_check_branch
        %130 = sbr.rel (%p128) target = $region24
      $region23: #{tpu_custom_call.1} parent=5 // pred_region
        // Predicated region
        $region25: #{tpu_custom_call.1} parent=23 // pred_check
          %p131 = pneg %p32
        $region26: #{tpu_custom_call.1} parent=23 // pred_check_branch
          %133 = sbr.rel (%p131) target = $region28
        $region27: #{tpu_custom_call.1} parent=23 // pred_region
          %p134 = scmp.lt.s32.totalorder %s12, 1
          %s135 = scalar_select %p134, %s12, 1
          %s136 = smul.addr %s135, 8
          %s137 = scalar_lea.vmem %s0, %s136
        $region28: #{tpu_custom_call.1} parent=23 // pred_fallthru
          _
      $region24: #{tpu_custom_call.1} parent=5 // pred_fallthru
        _
      %p138 = scmp.le.s32.totalorder 1, %s12
      %p139 = scmp.lt.s32.totalorder %s12, 3
      %p140 = pnand %p138, %p139
      %p141 = pneg %p140
      // Predicated region
      $region29: #{tpu_custom_call.1} parent=5 // pred_check
        _
      $region30: #{tpu_custom_call.1} parent=5 // pred_check_branch
        %143 = sbr.rel (%p140) target = $region32
      $region31: #{tpu_custom_call.1} parent=5 // pred_region
        %s144 = ssub.s32 %s12, 1
        %p145 = scmp.lt.s32.totalorder %s17, 1
        %s146 = scalar_select %p145, %s17, 1
        %s147 = smul.addr %s146, 8
        %s148 = scalar_lea.vmem %s0, %s147
        %p149 = pneg %p38
        %p150 = pneg %p35
        %p151 = pneg %p59
        %p152 = pneg %p56
        %p153 = pneg %p80
        %p154 = pneg %p77
        %p155 = pneg %p106
        %p156 = pneg %p103
        %s157 = sand.u32 %s93, 1
        %s158 = scalar_lea.sflag [#allocation3], %s157
        %s159 = sand.u32 %s93, 1
        %s160 = smul.addr %s159, 4
        %s161 = scalar_lea.vmem [#allocation2], %s160
        %p162 = scmp.lt.s32.totalorder %s17, 1
        %s163 = scalar_select %p162, %s17, 1
        %s164 = smul.addr %s163, 8
        %s165 = scalar_lea.vmem %s0, %s164
        %v167 = vld [vmem:[%s165] sm:$0xff]
        %v168 = vpack.c.bf16 %v167, %v167
        %v169 = vld [vmem:[%s1] sm:$0xf]
        %v170 = vld [vmem:[%s1 + $0x4] sm:$0xf]
        %v171 = vld [vmem:[%s1 + $0x8] sm:$0xf]
        %v172 = vld [vmem:[%s1 + $0xc] sm:$0xf]
        %v173 = vld [vmem:[%s2] sm:$0x1]
        %v175 = vperm.slane %v173, 0
        %v181 = vunpack.c.l.b16 %v169
        %v182 = vunpack.c.l.b16 %v170
        %v183 = vunpack.c.l.b16 %v171
        %v184 = vunpack.c.l.b16 %v172
        %v185 = vpack.c.b16 %v182, %v181
        %v186 = vpack.c.b16 %v184, %v183
        %vm189 = vcmask 261120
        %v191 = vsel %vm189, %v168, 0
        %193 = vmatpush.bf16.msra.mxu0 0
        %194 = vmatpush.bf16.msra.mxu0 0
        %195 = vmatpush.bf16.msra.mxu0 0
        %196 = vmatpush.bf16.msra.mxu0 0
        %197 = vmatpush.bf16.msra.mxu0 0
        %198 = vmatpush.bf16.msra.mxu0 0
        %199 = vmatpush.bf16.msra.mxu0 %v186
        %200 = vmatpush.bf16.msra.mxu0 %v185
        %201 = vmatmul.bf16.gmra.mxu0 %v191
        %v202 = vpop.f32.mrf.mxu0
        %v203 = vadd.f32 %v175, %v202
        %v204 = vpop.f32.mrf.mxu0
        %205 = vdwg.mxu0
        %vm206 = vcmask 130048
        %v207 = vsel %vm206, %v203, -inf
        %208 = vmax.xlane.f32.xlu0 %v207
        %v209 = vpop.xlane.xlu0 %208
        %v210 = vsub.f32 %v203, %v209
        %v211 = vmul.f32 %v210, 1.442695
        %v212 = vpow.pop %v211
        %v213 = vsel %vm206, %v212, 0.0
        %214 = vadd.xlane.f32.xlu0 %v213
        %v215 = vpop.xlane.xlu0 %214
        %v216 = vlog2.pop %v215
        %v217 = vmul.f32 %v216, 0.6931472
        %v218 = vsub.f32 %v210, %v217
        %v219 = vpack.c.bf16 %v218, %v218
        %vm220 = vcmask 125952
        %221 = vst.msk [vmem:[%s161] sm:$0xf] %vm220, %v219
        %s222 = sand.u32 %s93, 1
        %s223 = scalar_lea.sflag [#allocation3], %s222
        %s224 = sand.u32 %s93, 1
        %s225 = smul.addr %s224, 4
        %s226 = scalar_lea.vmem [#allocation2], %s225
        // Predicated region
        $region33: #{tpu_custom_call.1} parent=31 // pred_check
          %p227 = pneg %p103
        $region34: #{tpu_custom_call.1} parent=31 // pred_check_branch
          %229 = sbr.rel (%p227) target = $region36
        $region35: #{tpu_custom_call.1} parent=31 // pred_region
          %231 = vsyncadd %s223, 0
          %s232 = smul.addr %s17, 4
          %s233 = scalar_lea.hbm %s3, %s232
          %s235 = sshll.u32 %s226, 4
          %s236 = int_to_ptr.vmem [resolvable:$true] %s235
          %s237 = sshll.u32 %s233, 4
          %s238 = int_to_ptr.hbm [resolvable:$true] %s237
          %240 = dma.vmem_to_hbm [thread:$0]  %s236, 64, %s238, %s223
        $region36: #{tpu_custom_call.1} parent=31 // pred_fallthru
          _
      $region32: #{tpu_custom_call.1} parent=5 // pred_fallthru
        _
      %p241 = scmp.le.s32.totalorder 2, %s12
      // Predicated region
      $region37: #{tpu_custom_call.1} parent=5 // pred_check
        %p242 = pneg %p241
      $region38: #{tpu_custom_call.1} parent=5 // pred_check_branch
        %244 = sbr.rel (%p242) target = $region40
      $region39: #{tpu_custom_call.1} parent=5 // pred_region
        %s245 = ssub.s32 %s12, 2
        // Predicated region
        $region41: #{tpu_custom_call.1} parent=39 // pred_check
          %p246 = pneg %p109
        $region42: #{tpu_custom_call.1} parent=39 // pred_check_branch
          %248 = sbr.rel (%p246) target = $region44
        $region43: #{tpu_custom_call.1} parent=39 // pred_region
          %s249 = sand.u32 %s94, 1
          %s250 = scalar_lea.sflag [#allocation3], %s249
          %s251 = sand.u32 %s94, 1
          %s252 = smul.addr %s251, 4
          %s253 = scalar_lea.vmem [#allocation2], %s252
          %255 = dma.done %s250, 64
        $region44: #{tpu_custom_call.1} parent=39 // pred_fallthru
          _
      $region40: #{tpu_custom_call.1} parent=5 // pred_fallthru
        _
    $region6: #{tpu_custom_call.1} parent=1 // loop_footer
      %s16 = sadd.s32 1, %s12
    $region7: #{tpu_custom_call.1} parent=1 // loop_footer_branch
      %11 = sbr.rel target = $region3
    $region8: #{tpu_custom_call.1} parent=1 // loop_exit
      _
    %256 = vsyncpa [#allocation3], 1
    %s257 = scalar_lea.sflag [#allocation3], 1
    %258 = vsyncpa %s257, 1

</llo_original>
